<compile_context>
chip_gen: v6e
topology: v6e:2x2x1
jax: 0.10.0
libtpu: 0.0.40
codegen_flags: <defaults>
</compile_context>

<pallas_src>
import jax
import jax.numpy as jnp
from jax.experimental import pallas as pl
from jax.experimental.pallas import tpu as pltpu

# Safe on every generation: <= v7x 64 MiB physical, raises v5e's 16 MiB default.
_VMEM_LIMIT = 32 * 1024 * 1024


# ---------------------------------------------------------------------------
# Pallas kernel 1: farthest point sampling (VMEM-resident running distance)
# ---------------------------------------------------------------------------
def _fps_kernel(p_ref, idx_ref):
    # p_ref [3, N] channels-first (lane-dense), idx_ref [L, 1] int32.
    N = p_ref.shape[1]
    L = idx_ref.shape[0]
    px = p_ref[0:1, :]
    py = p_ref[1:2, :]
    pz = p_ref[2:3, :]                                               # [1, N]
    col = jax.lax.broadcasted_iota(jnp.int32, (1, N), 1).astype(jnp.float32)
    big = jnp.float32(N)

    # Deterministic start at index 0 (matches the plain-JAX reference FPS).
    idx_ref[0:1, :] = jnp.zeros((1, 1), jnp.int32)

    def body(i, carry):
        dist, cx, cy, cz = carry
        dx = px - cx
        dy = py - cy
        dz = pz - cz
        dist = jnp.minimum(dist, dx * dx + dy * dy + dz * dz)        # [1, N]
        m = jnp.max(dist, axis=-1, keepdims=True)                    # [1, 1]
        sel = jnp.min(jnp.where(dist == m, col, big), axis=-1,
                      keepdims=True)                                 # [1, 1]
        idx_ref[pl.ds(i, 1), :] = sel.astype(jnp.int32)
        # Selected point's coords via masked reduce (no dynamic lane gather).
        mask = col == sel
        cx = jnp.sum(jnp.where(mask, px, 0.0), axis=-1, keepdims=True)
        cy = jnp.sum(jnp.where(mask, py, 0.0), axis=-1, keepdims=True)
        cz = jnp.sum(jnp.where(mask, pz, 0.0), axis=-1, keepdims=True)
        return dist, cx, cy, cz

    dist0 = jnp.full((1, N), jnp.inf, jnp.float32)
    jax.lax.fori_loop(1, L, body, (dist0, px[:, 0:1], py[:, 0:1], pz[:, 0:1]))


def fps_indices(points_cf, n_samples):
    """points_cf [B, 3, N] -> [B, n_samples] int32 FPS center indices."""
    B, _, N = points_cf.shape
    out = pl.pallas_call(
        _fps_kernel,
        out_shape=jax.ShapeDtypeStruct((B, n_samples, 1), jnp.int32),
        grid=(B,),
        in_specs=[pl.BlockSpec((None, 3, N), lambda b: (b, 0, 0))],
        out_specs=pl.BlockSpec((None, n_samples, 1), lambda b: (b, 0, 0)),
        compiler_params=pltpu.CompilerParams(
            dimension_semantics=("parallel",),
            vmem_limit_bytes=_VMEM_LIMIT),
    )(points_cf)
    return out[..., 0]


# ---------------------------------------------------------------------------
# Pallas kernel 2: fused pairwise squared distance + k-nearest-neighbour select
# ---------------------------------------------------------------------------
def _knn_kernel(c_ref, p_ref, idx_ref):
    # c_ref [TL, 3], p_ref [3, N] channels-first, idx_ref [TL, K] int32.
    TL = c_ref.shape[0]
    N = p_ref.shape[1]
    K = idx_ref.shape[1]

    c = c_ref[...]                                                   # [TL, 3]
    px = p_ref[0:1, :]
    py = p_ref[1:2, :]
    pz = p_ref[2:3, :]                                               # [1, N]
    # Exact ||c - p||^2 via three broadcast FMAs on the VPU (lane-dense over N,
    # no MXU dot, no cancellation, result is >= 0 by construction).
    dx = c[:, 0:1] - px
    dy = c[:, 1:2] - py
    dz = c[:, 2:3] - pz
    d = dx * dx + dy * dy + dz * dz                                  # [TL, N]

    col = jax.lax.broadcasted_iota(jnp.int32, (TL, N), 1).astype(jnp.float32)
    big = jnp.float32(N)
    # K is small & static (8/16): unrolled iterative min-extraction == top_k of
    # -dist with lowest-index tie-breaking.  `d` and the selected columns stay
    # local values (no per-iteration VMEM scratch round trips); indices are
    # stored once at the end.
    # TODO(synk): for very large N, tile the N axis with a running top-K merge
    # so the [TL, N] working set stays within a fixed VMEM budget.
    sels = []
    for _ in range(K):
        m = jnp.min(d, axis=-1, keepdims=True)                       # [TL, 1]
        sel = jnp.min(jnp.where(d == m, col, big), axis=-1,
                      keepdims=True)                                 # [TL, 1]
        sels.append(sel)
        d = jnp.where(col == sel, jnp.inf, d)
    idx_ref[...] = jnp.concatenate(sels, axis=-1).astype(jnp.int32)


def _pick_tl(L):
    """Centers per kNN grid step: sublane-aligned, <= 128 so the [TL, N]
    distance slab stays small even at production N, while covering L exactly."""
    divs = [d for d in range(1, L + 1) if L % d == 0]
    valid = [d for d in divs if d % 8 == 0 or d == L]
    cands = [d for d in valid if d <= 128]
    return max(cands) if cands else min(valid)


def knn_indices(centers, points_cf, k):
    """centers [B,L,3], points_cf [B,3,N] -> [B,L,k] int32 nearest indices."""
    B, L, _ = centers.shape
    _, _, N = points_cf.shape
    TL = _pick_tl(L)
    return pl.pallas_call(
        _knn_kernel,
        out_shape=jax.ShapeDtypeStruct((B, L, k), jnp.int32),
        grid=(B, L // TL),
        in_specs=[pl.BlockSpec((None, TL, 3), lambda b, l: (b, l, 0)),
                  pl.BlockSpec((None, 3, N), lambda b, l: (b, 0, 0))],
        out_specs=pl.BlockSpec((None, TL, k), lambda b, l: (b, l, 0)),
        compiler_params=pltpu.CompilerParams(
            dimension_semantics=("parallel", "parallel"),
            vmem_limit_bytes=_VMEM_LIMIT),
    )(centers, points_cf)


# ---------------------------------------------------------------------------
# Pallas kernel 3: PointNet-style PatchEncoder (the matmul / reduce hot path)
# ---------------------------------------------------------------------------
def _patch_encoder_kernel(rel_ref, feat_ref, w1r_ref, w1f_ref, b1_ref,
                          w2_ref, b2_ref, w3g_ref, w3l_ref, b3_ref,
                          w4_ref, b4_ref, o_ref):
    TP, K, _ = rel_ref.shape
    Cf = feat_ref.shape[-1]
    rel = rel_ref[...].reshape(TP * K, 3).astype(jnp.bfloat16)
    feat = feat_ref[...].reshape(TP * K, Cf).astype(jnp.bfloat16)

    # first_conv: conv1(+folded BN) -> ReLU -> conv2.
    # conv1 split as [rel | feat] keeps encoder 2's contraction a clean 128
    # (instead of a 131-deep contraction padded to 256 lanes).
    h = (jnp.dot(rel, w1r_ref[...], preferred_element_type=jnp.float32)
         + jnp.dot(feat, w1f_ref[...], preferred_element_type=jnp.float32)
         + b1_ref[...])
    h = jnp.maximum(h, 0.0)
    h = (jnp.dot(h.astype(jnp.bfloat16), w2_ref[...],
                 preferred_element_type=jnp.float32) + b2_ref[...])
    H1 = h.shape[-1]

    # global max over the K patch points.
    g = jnp.max(h.reshape(TP, K, H1), axis=1)                        # [TP, H1]

    # concat([global, local]) @ w3 == g @ w3[:H1] (bcast over K) + h @ w3[H1:]
    # -> global half computed once per patch (not K times), no lane concat.
    hg = jnp.dot(g.astype(jnp.bfloat16), w3g_ref[...],
                 preferred_element_type=jnp.float32)                 # [TP, 2H1]
    hl = jnp.dot(h.astype(jnp.bfloat16), w3l_ref[...],
                 preferred_element_type=jnp.float32)                 # [TP*K, 2H1]
    h2 = jnp.maximum(hl.reshape(TP, K, 2 * H1) + hg[:, None, :] + b3_ref[...],
                     0.0)
    h2 = (jnp.dot(h2.reshape(TP * K, 2 * H1).astype(jnp.bfloat16), w4_ref[...],
                  preferred_element_type=jnp.float32) + b4_ref[...])
    Cout = h2.shape[-1]

    # final max over patch points.
    o_ref[...] = jnp.max(h2.reshape(TP, K, Cout), axis=1)            # [TP, Cout]


def _pick_tp(M, K):
    """Patches per encoder grid step: ~256 MXU rows per step (fills one MXU
    pass on v5e..v7x), prefer >= 4 grid steps (2 per v7x TensorCore) so the
    automatic double-buffering has DMA to hide behind compute, and keep the
    output tile sublane-aligned (TP % 8 == 0 or TP == M)."""
    divs = [d for d in range(1, M + 1) if M % d == 0]
    valid = [d for d in divs if d % 8 == 0 or d == M]
    target = max(1, 256 // K)
    for min_steps in (4, 2, 1):
        cands = [d for d in valid if d <= target and M // d >= min_steps]
        if cands:
            return max(cands)
    return min(valid)


def patch_encoder(x, params):
    """x: [B, L, K, 3 + Cf] (rel coords first) -> [B, L, Cout] f32."""
    B, L, K, _ = x.shape
    w1r, w1f, b1, w2, b2, w3g, w3l, b3, w4, b4 = params
    Cf = w1f.shape[0]
    H0, H1, Cout = w1r.shape[1], w2.shape[1], w4.shape[1]

    M = B * L
    # TODO(synk): at production M*K, stream rel (3-wide) channels-first to avoid
    # the 3->128 lane padding of this block; negligible at demo sizes.
    rel = x[..., :3].reshape(M, K, 3)
    feat = x[..., 3:].reshape(M, K, Cf)
    TP = _pick_tp(M, K)
    const = lambda i: (0, 0)

    out = pl.pallas_call(
        _patch_encoder_kernel,
        out_shape=jax.ShapeDtypeStruct((M, Cout), jnp.float32),
        grid=(M // TP,),
        in_specs=[
            pl.BlockSpec((TP, K, 3), lambda i: (i, 0, 0)),
            pl.BlockSpec((TP, K, Cf), lambda i: (i, 0, 0)),
            pl.BlockSpec((3, H0), const), pl.BlockSpec((Cf, H0), const),
            pl.BlockSpec((1, H0), const),
            pl.BlockSpec((H0, H1), const), pl.BlockSpec((1, H1), const),
            pl.BlockSpec((H1, 2 * H1), const), pl.BlockSpec((H1, 2 * H1), const),
            pl.BlockSpec((1, 2 * H1), const),
            pl.BlockSpec((2 * H1, Cout), const), pl.BlockSpec((1, Cout), const),
        ],
        out_specs=pl.BlockSpec((TP, Cout), lambda i: (i, 0)),
        compiler_params=pltpu.CompilerParams(
            dimension_semantics=("parallel",),
            vmem_limit_bytes=_VMEM_LIMIT),
    )(rel, feat, w1r, w1f, b1, w2, b2, w3g, w3l, b3, w4, b4)
    return out.reshape(B, L, Cout)


# ---------------------------------------------------------------------------
# Plain-JAX glue: gathers (data-dependent indexing) and grouping
# ---------------------------------------------------------------------------
def _gather(points, idx):
    # points [B, N, C], idx [B, ...] -> [B, ..., C]
    return jax.vmap(lambda p, i: p[i])(points, idx)


def knn_grouper(coords, features, num_patches, patch_size, radius=None,
                use_fps=True):
    B, N, _ = coords.shape
    points_cf = jnp.transpose(coords, (0, 2, 1))                     # [B, 3, N]
    if use_fps:
        idx = fps_indices(points_cf, num_patches)                    # Pallas FPS
    else:
        # TODO(synk): original KNNGrouper uses random center sampling when
        # use_fps=False; we take the first `num_patches` points for determinism.
        idx = jnp.broadcast_to(jnp.arange(num_patches, dtype=jnp.int32),
                               (B, num_patches))
    centers = _gather(coords, idx)                                   # [B, L, 3]
    knn_idx = knn_indices(centers, points_cf, patch_size)            # Pallas kNN
    # TODO(synk): the neighbor gather stays in XLA because the grouped features
    # tensor is part of the module's returned dict and must be materialized
    # anyway; fusing it into the encoder (scalar-prefetch / manual DMA gather)
    # would only save the read-back.
    nbr_coords = _gather(coords, knn_idx)                            # [B, L, K, 3]
    nbr_feats = _gather(features, knn_idx)                           # [B, L, K, C]
    rel = nbr_coords - centers[:, :, None, :]
    if radius is not None:
        rel = rel / radius
    grouped = jnp.concatenate([rel, nbr_feats], axis=-1)             # [B, L, K, 3+C]
    return {"centers": centers, "knn_idx": knn_idx, "features": grouped}


# ---------------------------------------------------------------------------
# Parameter construction (deterministic, synthetic)
# ---------------------------------------------------------------------------
def init_patch_encoder_params(key, in_channels, out_channels, hidden_dims,
                              bn_eps=1e-5):
    h0, h1 = hidden_dims
    ks = jax.random.split(key, 8)

    def linear(kw, kb, ci, co):
        w = jax.random.normal(kw, (ci, co), jnp.float32) * (ci ** -0.5)
        b = jax.random.normal(kb, (1, co), jnp.float32) * 0.01
        return w, b

    w1, b1 = linear(ks[0], ks[1], in_channels, h0)
    w2, b2 = linear(ks[2], ks[3], h0, h1)
    w3, b3 = linear(ks[4], ks[5], 2 * h1, 2 * h1)
    w4, b4 = linear(ks[6], ks[7], 2 * h1, out_channels)

    def fold_bn(w, b, c):
        # eval-mode BatchNorm1d with default stats (gamma=1, beta=0, mean=0,
        # var=1).  Real checkpoints must fold the actual running statistics.
        gamma = jnp.ones((c,), jnp.float32)
        beta = jnp.zeros((c,), jnp.float32)
        mean = jnp.zeros((c,), jnp.float32)
        var = jnp.ones((c,), jnp.float32)
        scale = gamma * jax.lax.rsqrt(var + bn_eps)
        shift = beta - mean * scale
        return w * scale[None, :], b * scale[None, :] + shift[None, :]

    w1, b1 = fold_bn(w1, b1, h0)
    w3, b3 = fold_bn(w3, b3, 2 * h1)

    # Split conv1 rows into [rel(3) | feat] and conv3 rows into [global | local]
    # (matching the concat orders used by the grouper / encoder); weights bf16.
    w1r = w1[:3].astype(jnp.bfloat16)
    w1f = w1[3:].astype(jnp.bfloat16)
    w3g = w3[:h1].astype(jnp.bfloat16)
    w3l = w3[h1:].astype(jnp.bfloat16)
    return (w1r, w1f, b1, w2.astype(jnp.bfloat16), b2,
            w3g, w3l, b3, w4.astype(jnp.bfloat16), b4)


def _patch_encoder_ref(x, params):
    """Pure-JAX f32 reference of the PatchEncoder (same folded/split params)."""
    w1r, w1f, b1, w2, b2, w3g, w3l, b3, w4, b4 = [
        jnp.asarray(p, jnp.float32) for p in params]
    rel, feat = x[..., :3], x[..., 3:]
    h = jnp.maximum(rel @ w1r + feat @ w1f + b1, 0.0)
    h = h @ w2 + b2                                                  # [B,L,K,H1]
    g = jnp.max(h, axis=2)                                           # [B,L,H1]
    h2 = jnp.maximum(h @ w3l + (g @ w3g)[:, :, None, :] + b3, 0.0)
    h2 = h2 @ w4 + b4
    return jnp.max(h2, axis=2)


# ---------------------------------------------------------------------------
# PatchEmbedHier forward
# ---------------------------------------------------------------------------
def patch_embed_hier(coords, features, params1, params2,
                     num_patches, patch_size, radius=None):
    r1 = radius[0] if radius is not None else None
    r2 = radius[1] if radius is not None else None
    patches1 = knn_grouper(coords, features, num_patches[0], patch_size[0],
                           radius=r1, use_fps=True)
    x1 = patch_encoder(patches1["features"], params1)
    patches1["embeddings"] = x1
    patches2 = knn_grouper(patches1["centers"], x1, num_patches[1],
                           patch_size[1], radius=r2, use_fps=False)
    x2 = patch_encoder(patches2["features"], params2)
    patches2["embeddings"] = x2
    return [patches1, patches2]


if __name__ == "__main__":
    key = jax.random.PRNGKey(0)
    kc, kf, kp1, kp2 = jax.random.split(key, 4)

    B, N = 2, 256
    feat_channels = 3
    num_patches = [32, 8]
    patch_size = [16, 8]
    in_channels = feat_channels + 3      # KNNGrouper prepends relative coords
    out_channels = 64

    coords = jax.random.normal(kc, (B, N, 3), jnp.float32)
    features = jax.random.normal(kf, (B, N, feat_channels), jnp.float32)

    params1 = init_patch_encoder_params(kp1, in_channels, 128, [64, 128])
    params2 = init_patch_encoder_params(kp2, 128 + 3, out_channels, [128, 256])

    out = patch_embed_hier(coords, features, params1, params2,
                           num_patches, patch_size, radius=None)
    jax.block_until_ready(out)

    p1, p2 = out
    assert p1["features"].shape == (B, num_patches[0], patch_size[0], in_channels)
    assert p1["embeddings"].shape == (B, num_patches[0], 128)
    assert p2["features"].shape == (B, num_patches[1], patch_size[1], 128 + 3)
    assert p2["embeddings"].shape == (B, num_patches[1], out_channels)

    # FPS sanity: indices in range and distinct per batch.
    fps_idx = fps_indices(jnp.transpose(coords, (0, 2, 1)), num_patches[0])
    assert fps_idx.shape == (B, num_patches[0])
    assert int(jnp.min(fps_idx)) >= 0 and int(jnp.max(fps_idx)) < N
    for b in range(B):
        assert int(jnp.unique(fps_idx[b]).shape[0]) == num_patches[0]

    # kNN sanity: indices in range; nearest neighbour of a center is itself.
    assert int(jnp.min(p1["knn_idx"])) >= 0 and int(jnp.max(p1["knn_idx"])) < N
    assert int(jnp.min(p2["knn_idx"])) >= 0
    assert int(jnp.max(p2["knn_idx"])) < num_patches[0]
    self_rel = p1["features"][:, :, 0, :3]          # rel coords of 1st neighbour
    assert bool(jnp.allclose(self_rel, jnp.zeros_like(self_rel), atol=1e-6))

    # Numerical check of the Pallas encoders vs a pure-JAX f32 reference that
    # uses the same folded/split parameters (tolerance covers bf16 operands).
    ref1 = _patch_encoder_ref(p1["features"], params1)
    ref2 = _patch_encoder_ref(p2["features"], params2)
    assert bool(jnp.allclose(p1["embeddings"], ref1, atol=2e-1, rtol=5e-2))
    assert bool(jnp.allclose(p2["embeddings"], ref2, atol=2e-1, rtol=5e-2))

    print("KERNEL_OK")
</pallas_src>

<mosaic_0001>
module attributes {stable_mosaic.version = 11 : i64} {
  func.func @_fps_kernel(%arg0: i32, %arg1: memref<1x3x256xf32, #tpu.memory_space<vmem>>, %arg2: memref<1x32x1xi32, #tpu.memory_space<vmem>>) attributes {dimension_semantics = [#tpu.dimension_semantics<parallel>], iteration_bounds = array<i64: 2>, scalar_prefetch = 0 : i64, scratch_operands = 0 : i64, tpu.core_type = #tpu.core_type<tc>, window_params = [{transform_indices = @transform_0, window_bounds = array<i64: 1, 3, 256>}, {transform_indices = @transform_1, window_bounds = array<i64: 1, 32, 1>}]} {
    %c0 = arith.constant 0 : index
    %c0_0 = arith.constant 0 : index
    %c0_1 = arith.constant 0 : index
    %0 = vector.load %arg1[%c0, %c0_0, %c0_1] : memref<1x3x256xf32, #tpu.memory_space<vmem>>, vector<1x1x256xf32>
    %1 = vector.shape_cast %0 : vector<1x1x256xf32> to vector<1x256xf32>
    %c0_2 = arith.constant 0 : index
    %c1 = arith.constant 1 : index
    %c0_3 = arith.constant 0 : index
    %2 = vector.load %arg1[%c0_2, %c1, %c0_3] : memref<1x3x256xf32, #tpu.memory_space<vmem>>, vector<1x1x256xf32>
    %3 = vector.shape_cast %2 : vector<1x1x256xf32> to vector<1x256xf32>
    %c0_4 = arith.constant 0 : index
    %c2 = arith.constant 2 : index
    %c0_5 = arith.constant 0 : index
    %4 = vector.load %arg1[%c0_4, %c2, %c0_5] : memref<1x3x256xf32, #tpu.memory_space<vmem>>, vector<1x1x256xf32>
    %5 = vector.shape_cast %4 : vector<1x1x256xf32> to vector<1x256xf32>
    %6 = tpu.iota {dimensions = array<i32: 1>} : vector<1x256xi32>
    %7 = arith.sitofp %6 : vector<1x256xi32> to vector<1x256xf32>
    %c0_i32 = arith.constant 0 : i32
    %8 = vector.broadcast %c0_i32 : i32 to vector<1x1xi32>
    %c0_6 = arith.constant 0 : index
    %c0_7 = arith.constant 0 : index
    %c0_8 = arith.constant 0 : index
    %9 = vector.load %arg2[%c0_6, %c0_7, %c0_8] : memref<1x32x1xi32, #tpu.memory_space<vmem>>, vector<1x1x1xi32>
    %10 = vector.shape_cast %9 : vector<1x1x1xi32> to vector<1x1xi32>
    %11 = vector.shape_cast %8 : vector<1x1xi32> to vector<1x1x1xi32>
    tpu.vector_store %arg2[%c0_6, %c0_7, %c0_8], %11 {strides = array<i32>} : memref<1x32x1xi32, #tpu.memory_space<vmem>>, vector<1x1x1xi32>,
    %cst = arith.constant 0x7F800000 : f32
    %12 = vector.broadcast %cst : f32 to vector<1x256xf32>
    %13 = vector.extract_strided_slice %1 {offsets = [0, 0], sizes = [1, 1], strides = [1, 1]} : vector<1x256xf32> to vector<1x1xf32>
    %14 = vector.extract_strided_slice %3 {offsets = [0, 0], sizes = [1, 1], strides = [1, 1]} : vector<1x256xf32> to vector<1x1xf32>
    %15 = vector.extract_strided_slice %5 {offsets = [0, 0], sizes = [1, 1], strides = [1, 1]} : vector<1x256xf32> to vector<1x1xf32>
    %cst_9 = arith.constant 2.560000e+02 : f32
    %c1_i32 = arith.constant 1 : i32
    %c31_i32 = arith.constant 31 : i32
    %16 = arith.addi %c1_i32, %c31_i32 : i32
    %c1_i32_10 = arith.constant 1 : i32
    %17:4 = scf.for %arg3 = %c1_i32 to %16 step %c1_i32_10 iter_args(%arg4 = %12, %arg5 = %13, %arg6 = %14, %arg7 = %15) -> (vector<1x256xf32>, vector<1x1xf32>, vector<1x1xf32>, vector<1x1xf32>)  : i32 {
      %18 = vector.broadcast %arg5 : vector<1x1xf32> to vector<1x256xf32>
      %19 = arith.subf %1, %18 : vector<1x256xf32>
      %20 = vector.broadcast %arg6 : vector<1x1xf32> to vector<1x256xf32>
      %21 = arith.subf %3, %20 : vector<1x256xf32>
      %22 = vector.broadcast %arg7 : vector<1x1xf32> to vector<1x256xf32>
      %23 = arith.subf %5, %22 : vector<1x256xf32>
      %24 = arith.mulf %19, %19 : vector<1x256xf32>
      %25 = arith.mulf %21, %21 : vector<1x256xf32>
      %26 = arith.addf %24, %25 : vector<1x256xf32>
      %27 = arith.mulf %23, %23 : vector<1x256xf32>
      %28 = arith.addf %26, %27 : vector<1x256xf32>
      %29 = arith.minimumf %arg4, %28 : vector<1x256xf32>
      %cst_12 = arith.constant dense<0xFF800000> : vector<1xf32>
      %30 = vector.multi_reduction <maximumf>, %29, %cst_12 [1] : vector<1x256xf32> to vector<1xf32>
      %31 = vector.shape_cast %30 : vector<1xf32> to vector<1x1xf32>
      %32 = vector.broadcast %31 : vector<1x1xf32> to vector<1x256xf32>
      %33 = arith.cmpf oeq, %29, %32 : vector<1x256xf32>
      %34 = vector.broadcast %cst_9 : f32 to vector<1x256xf32>
      %35 = arith.select %33, %7, %34 : vector<1x256xi1>, vector<1x256xf32>
      %cst_13 = arith.constant dense<0x7F800000> : vector<1xf32>
      %36 = vector.multi_reduction <minimumf>, %35, %cst_13 [1] : vector<1x256xf32> to vector<1xf32>
      %37 = vector.shape_cast %36 : vector<1xf32> to vector<1x1xf32>
      %38 = arith.fptosi %37 : vector<1x1xf32> to vector<1x1xi32>
      %c0_14 = arith.constant 0 : index
      %39 = arith.index_cast %arg3 : i32 to index
      %c0_15 = arith.constant 0 : index
      %40 = vector.load %arg2[%c0_14, %39, %c0_15] : memref<1x32x1xi32, #tpu.memory_space<vmem>>, vector<1x1x1xi32>
      %41 = vector.shape_cast %40 : vector<1x1x1xi32> to vector<1x1xi32>
      %42 = vector.shape_cast %38 : vector<1x1xi32> to vector<1x1x1xi32>
      tpu.vector_store %arg2[%c0_14, %39, %c0_15], %42 {strides = array<i32>} : memref<1x32x1xi32, #tpu.memory_space<vmem>>, vector<1x1x1xi32>,
      %43 = vector.broadcast %37 : vector<1x1xf32> to vector<1x256xf32>
      %44 = arith.cmpf oeq, %7, %43 : vector<1x256xf32>
      %cst_16 = arith.constant 0.000000e+00 : f32
      %45 = vector.broadcast %cst_16 : f32 to vector<1x256xf32>
      %46 = arith.select %44, %1, %45 : vector<1x256xi1>, vector<1x256xf32>
      %cst_17 = arith.constant dense<0.000000e+00> : vector<1xf32>
      %47 = vector.multi_reduction <add>, %46, %cst_17 [1] : vector<1x256xf32> to vector<1xf32>
      %48 = vector.shape_cast %47 : vector<1xf32> to vector<1x1xf32>
      %cst_18 = arith.constant 0.000000e+00 : f32
      %49 = vector.broadcast %cst_18 : f32 to vector<1x256xf32>
      %50 = arith.select %44, %3, %49 : vector<1x256xi1>, vector<1x256xf32>
      %cst_19 = arith.constant dense<0.000000e+00> : vector<1xf32>
      %51 = vector.multi_reduction <add>, %50, %cst_19 [1] : vector<1x256xf32> to vector<1xf32>
      %52 = vector.shape_cast %51 : vector<1xf32> to vector<1x1xf32>
      %cst_20 = arith.constant 0.000000e+00 : f32
      %53 = vector.broadcast %cst_20 : f32 to vector<1x256xf32>
      %54 = arith.select %44, %5, %53 : vector<1x256xi1>, vector<1x256xf32>
      %cst_21 = arith.constant dense<0.000000e+00> : vector<1xf32>
      %55 = vector.multi_reduction <add>, %54, %cst_21 [1] : vector<1x256xf32> to vector<1xf32>
      %56 = vector.shape_cast %55 : vector<1xf32> to vector<1x1xf32>
      scf.yield %29, %48, %52, %56 : vector<1x256xf32>, vector<1x1xf32>, vector<1x1xf32>, vector<1x1xf32>
    }
    %c31_i32_11 = arith.constant 31 : i32
    return
  }
  func.func @transform_0(%arg0: i32) -> (i32, i32, i32) {
    %c0_i32 = arith.constant 0 : i32
    %c0_i32_0 = arith.constant 0 : i32
    %c0_i32_1 = arith.constant 0 : i32
    return %arg0, %c0_i32, %c0_i32_0 : i32, i32, i32
  }
  func.func @transform_1(%arg0: i32) -> (i32, i32, i32) {
    %c0_i32 = arith.constant 0 : i32
    %c0_i32_0 = arith.constant 0 : i32
    %c0_i32_1 = arith.constant 0 : i32
    return %arg0, %c0_i32, %c0_i32_0 : i32, i32, i32
  }
}

</mosaic_0001>

<llo_original>
// kernel: tpu_custom_call.1
$region0: #{tpu_custom_call.1}
  #allocation0 [shape = 'u32[]', space=smem, size = 0x4, offset = 0x4, fixed_abs, tag = 'smem constant byte address 0x4 - core index']
  #allocation1 [shape = 'u32[144,128]{1,0:T(1,128)}', space=vmem, size = 0x12000, scoped, tag = 'internal scratch']
  %s0 = inlined_call_operand.vmem [shape: f32[2,3,256], index: 0, kind: input, shape index: {}]
  %s1 = inlined_call_operand.vmem [shape: s32[2,32,1], index: 1, kind: output, shape index: {}]
  %s2 = sld [smem:[#allocation0]]
  $region44: #{tpu_custom_call.1} parent=0
    _
  %s4 = ssub.s32 1, %s2
  %s5 = scalar_select 0, %s4, %s2
  loop: start=0, step=1, limit=4
  $region2: #{tpu_custom_call.1} parent=0 // loop_pre_header
    _
  $region3: #{tpu_custom_call.1} parent=0 // loop_header
    %s7 = sphi 0, %s11
    %p8 = scmp.ge.s32.totalorder %s7, 4
    %s17 = sphi 0, %s19
    %s20 = sphi 0, %s17
    %s21 = sphi 0, %s20
    %s37 = sphi 0, %s21
    %s43 = sphi 0, %s45
    %s46 = sphi 0, %s43
    %s47 = sphi 0, %s46
    %s63 = sphi 0, %s47
  $region4: #{tpu_custom_call.1} parent=0 // loop_header_branch
    %10 = sbr.rel (%p8) target = $region8
  $region5: #{tpu_custom_call.1} parent=0 // loop_body
    %s12 = ssub.s32 %s7, 1
    %s13 = ssub.s32 %s7, 2
    %s14 = sadd.s32 %s7, 1
    %s15 = ssub.s32 %s7, %s14
    %p16 = scmp.eq.s32.totalorder %s15, 0
    %s18 = sadd.s32 %s17, 1
    %s19 = scalar_select %p16, %s17, %s18
    %p22 = pneg %p16
    %p23 = scmp.eq.s32.totalorder %s7, 1
    %p24 = por %p22, %p23
    %p25 = scmp.ne.s32.totalorder %s17, %s20
    %p26 = scmp.eq.s32.totalorder %s7, 0
    %p27 = por %p25, %p26
    %p28 = scmp.ne.s32.totalorder %s17, %s20
    %p29 = scmp.eq.s32.totalorder %s12, 1
    %p30 = por %p28, %p29
    %p31 = scmp.ne.s32.totalorder %s20, %s21
    %p32 = scmp.eq.s32.totalorder %s12, 0
    %p33 = por %p31, %p32
    %p34 = scmp.ne.s32.totalorder %s20, %s21
    %p35 = scmp.eq.s32.totalorder %s13, 1
    %p36 = por %p34, %p35
    %p38 = scmp.ne.s32.totalorder %s21, %s37
    %p39 = scmp.eq.s32.totalorder %s13, 0
    %p40 = por %p38, %p39
    %s41 = ssub.s32 %s7, %s14
    %p42 = scmp.eq.s32.totalorder %s41, 0
    %s44 = sadd.s32 %s43, 1
    %s45 = scalar_select %p42, %s43, %s44
    %p48 = pneg %p42
    %p49 = scmp.eq.s32.totalorder %s7, 1
    %p50 = por %p48, %p49
    %p51 = scmp.ne.s32.totalorder %s43, %s46
    %p52 = scmp.eq.s32.totalorder %s7, 0
    %p53 = por %p51, %p52
    %p54 = scmp.ne.s32.totalorder %s43, %s46
    %p55 = scmp.eq.s32.totalorder %s12, 1
    %p56 = por %p54, %p55
    %p57 = scmp.ne.s32.totalorder %s46, %s47
    %p58 = scmp.eq.s32.totalorder %s12, 0
    %p59 = por %p57, %p58
    %p60 = scmp.ne.s32.totalorder %s46, %s47
    %p61 = scmp.eq.s32.totalorder %s13, 1
    %p62 = por %p60, %p61
    %p64 = scmp.ne.s32.totalorder %s47, %s63
    %p65 = scmp.eq.s32.totalorder %s13, 0
    %p66 = por %p64, %p65
    %p67 = scmp.le.s32.totalorder 1, %s7
    %p68 = scmp.lt.s32.totalorder %s7, 3
    %p69 = pnand %p67, %p68
    %p70 = pneg %p69
    // Predicated region
    $region9: #{tpu_custom_call.1} parent=5 // pred_check
      _
    $region10: #{tpu_custom_call.1} parent=5 // pred_check_branch
      %72 = sbr.rel (%p69) target = $region12
    $region11: #{tpu_custom_call.1} parent=5 // pred_region
      %s73 = ssub.s32 %s7, 1
    $region12: #{tpu_custom_call.1} parent=5 // pred_fallthru
      _
    %p74 = scmp.lt.s32.totalorder %s7, 2
    // Predicated region
    $region13: #{tpu_custom_call.1} parent=5 // pred_check
      %p75 = pneg %p74
    $region14: #{tpu_custom_call.1} parent=5 // pred_check_branch
      %77 = sbr.rel (%p75) target = $region16
    $region15: #{tpu_custom_call.1} parent=5 // pred_region
      // Predicated region
      $region17: #{tpu_custom_call.1} parent=15 // pred_check
        %p78 = pneg %p27
      $region18: #{tpu_custom_call.1} parent=15 // pred_check_branch
        %80 = sbr.rel (%p78) target = $region20
      $region19: #{tpu_custom_call.1} parent=15 // pred_region
        %p81 = scmp.lt.s32.totalorder %s7, 1
        %s82 = scalar_select %p81, %s7, 1
        %s83 = smul.addr %s82, 2
        %s84 = smul.addr %s83, 4
        %s85 = scalar_lea.vmem %s0, %s84
      $region20: #{tpu_custom_call.1} parent=15 // pred_fallthru
        _
    $region16: #{tpu_custom_call.1} parent=5 // pred_fallthru
      _
    %p86 = scmp.le.s32.totalorder 1, %s7
    %p87 = scmp.lt.s32.totalorder %s7, 3
    %p88 = pnand %p86, %p87
    %p89 = pneg %p88
    // Predicated region
    $region21: #{tpu_custom_call.1} parent=5 // pred_check
      _
    $region22: #{tpu_custom_call.1} parent=5 // pred_check_branch
      %91 = sbr.rel (%p88) target = $region24
    $region23: #{tpu_custom_call.1} parent=5 // pred_region
      %s92 = ssub.s32 %s7, 1
      %p93 = scmp.lt.s32.totalorder %s12, 1
      %s94 = scalar_select %p93, %s12, 1
      %s95 = smul.addr %s94, 2
      %s96 = smul.addr %s95, 4
      %s97 = scalar_lea.vmem %s0, %s96
      %p98 = pneg %p33
      %p99 = pneg %p30
      %p100 = pneg %p59
      %p101 = pneg %p56
      %p102 = scmp.lt.s32.totalorder %s12, 1
      %s103 = scalar_select %p102, %s12, 1
      %s104 = smul.addr %s103, 4
      %s105 = smul.addr %s104, 8
      %s106 = scalar_lea.vmem %s1, %s105
      %p107 = scmp.lt.s32.totalorder %s12, 1
      %s108 = scalar_select %p107, %s12, 1
      %s109 = smul.addr %s108, 2
      %s110 = smul.addr %s109, 4
      %s111 = scalar_lea.vmem %s0, %s110
      %p112 = scmp.lt.s32.totalorder %s12, 1
      %s113 = scalar_select %p112, %s12, 1
      %s114 = smul.addr %s113, 4
      %s115 = smul.addr %s114, 8
      %s116 = scalar_lea.vmem %s1, %s115
      %v117 = vld [vmem:[%s111] ss:$4 sm:$0x3]
      %s118 = scalar_lea.vmem %s111, 1
      %v119 = vld [vmem:[%s118] ss:$4 sm:$0x3]
      %s120 = scalar_lea.vmem %s111, 2
      %v121 = vld [vmem:[%s120] ss:$4 sm:$0x3]
      %v122 = vlaneseq
      %v123 = vand.u32 %v122, 127
      %v124 = vadd.s32 %v123, 128
      %v125 = vcvt.s32.f32 %v123
      %v126 = vcvt.s32.f32 %v124
      %vm127 = vcmask 0
      %128 = vst.msk [vmem:[%s116] sm:$0x1] %vm127, 0
      loop: start=1, step=1, limit=32
      $region25: #{tpu_custom_call.1} parent=23 // loop_pre_header
        _
      $region26: #{tpu_custom_call.1} parent=23 // loop_header
        %s130 = sphi 1, %s134
        %p131 = scmp.ge.s32.totalorder %s130, 32
        %v135 = vphi inf, %v174
        %v136 = vphi %v117, %v256
        %v137 = vphi %v119, %v274
        %v138 = vphi %v121, %v292
      $region27: #{tpu_custom_call.1} parent=23 // loop_header_branch
        %133 = sbr.rel (%p131) target = $region31
      $region28: #{tpu_custom_call.1} parent=23 // loop_body
        %140 = vset.pattern.permute.xlu0 0
        %141 = vperm.xlu0 %140, %v136
        %v142 = vpop.permute.xlu0 %141
        %v143 = vlaneseq
        %v144 = vshrl.u32 %v143, 7
        %v145 = vsub.s32 0, %v144
        %v146 = vrot.slane %v142, %v145
        %v148 = vsub.f32 %v117, %v146
        %150 = vset.pattern.permute.xlu0 0
        %151 = vperm.xlu0 %150, %v137
        %v152 = vpop.permute.xlu0 %151
        %v153 = vlaneseq
        %v154 = vshrl.u32 %v153, 7
        %v155 = vsub.s32 0, %v154
        %v156 = vrot.slane %v152, %v155
        %v158 = vsub.f32 %v119, %v156
        %160 = vset.pattern.permute.xlu0 0
        %161 = vperm.xlu0 %160, %v138
        %v162 = vpop.permute.xlu0 %161
        %v163 = vlaneseq
        %v164 = vshrl.u32 %v163, 7
        %v165 = vsub.s32 0, %v164
        %v166 = vrot.slane %v162, %v165
        %v168 = vsub.f32 %v121, %v166
        %v169 = vmul.f32 %v148, %v148
        %v170 = vmul.f32 %v158, %v158
        %v171 = vadd.f32 %v169, %v170
        %v172 = vmul.f32 %v168, %v168
        %v173 = vadd.f32 %v171, %v172
        %v174 = vmin.f32 %v135, %v173
        %v176 = vlaneseq
        %v177 = vshrl.u32 %v176, 7
        %v178 = vsub.s32 0, %v177
        %v179 = vrot.slane %v174, %v178
        %v180 = vlaneseq
        %v181 = vshrl.u32 %v180, 7
        %v182 = vsub.s32 1, %v181
        %v183 = vrot.slane %v174, %v182
        %vm186 = vcmask 1040384
        %v187 = vsel %vm186, %v179, -inf
        %v188 = vsel %vm186, %v183, -inf
        %v189 = vmax.f32 %v187, %v188
        %190 = vmax.xlane.f32.xlu0 %v189
        %v191 = vpop.xlane.xlu0 %190
        %v193 = vlaneseq
        %v194 = vshrl.u32 %v193, 7
        %v195 = vsub.s32 0, %v194
        %v196 = vrot.slane %v191, %v195
        %vm198 = vcmp.eq.f32.partialorder %v174, %v196
        %v201 = vcombine.low %v125, %v126
        %v203 = vunpack.c.l.s4 1966171168
        %v204 = vunpack.c.0.s8 %v203
        %v205 = vlaneseq
        %v206 = vshrl.u32 %v205, 7
        %v207 = vsub.s32 %v204, %v206
        %v208 = vrot.slane %v201, %v207
        %v210 = vunpack.c.l.s4 1966171168
        %v211 = vunpack.c.0.s8 %v210
        %v212 = vlaneseq
        %v213 = vshrl.u32 %v212, 7
        %v214 = vsub.s32 %v211, %v213
        %v215 = vrot.slane %v208, %v214
        %v217 = vsel %vm198, %v215, 256.0
        %v219 = vlaneseq
        %v220 = vshrl.u32 %v219, 7
        %v221 = vsub.s32 0, %v220
        %v222 = vrot.slane %v217, %v221
        %v223 = vlaneseq
        %v224 = vshrl.u32 %v223, 7
        %v225 = vsub.s32 1, %v224
        %v226 = vrot.slane %v217, %v225
        %v229 = vsel %vm186, %v222, inf
        %v230 = vsel %vm186, %v226, inf
        %v231 = vmin.f32 %v229, %v230
        %232 = vmin.xlane.f32.xlu0 %v231
        %v233 = vpop.xlane.xlu0 %232
        %v234 = vcvt.f32.s32.to.zero.pseudo %v233
        %s235 = scalar_lea.vmem %s116, %s130
        %236 = vst.msk [vmem:[%s235] sm:$0x1] %vm127, %v234
        %vm237 = vcmp.eq.f32.partialorder %v125, %v233
        %vm238 = vcmp.eq.f32.partialorder %v126, %v233
        %v240 = vlaneseq
        %v241 = vshrl.u32 %v240, 7
        %v242 = vsub.s32 0, %v241
        %v243 = vrot.slane %v117, %v242
        %v244 = vlaneseq
        %v245 = vshrl.u32 %v244, 7
        %v246 = vsub.s32 1, %v245
        %v247 = vrot.slane %v117, %v246
        %v250 = vsel %vm237, %v243, 0.0
        %v251 = vsel %vm238, %v247, 0.0
        %v252 = vsel %vm186, %v250, 0.0
        %v253 = vsel %vm186, %v251, 0.0
        %v254 = vadd.f32 %v252, %v253
        %255 = vadd.xlane.f32.xlu0 %v254
        %v256 = vpop.xlane.xlu0 %255
        %v258 = vlaneseq
        %v259 = vshrl.u32 %v258, 7
        %v260 = vsub.s32 0, %v259
        %v261 = vrot.slane %v119, %v260
        %v262 = vlaneseq
        %v263 = vshrl.u32 %v262, 7
        %v264 = vsub.s32 1, %v263
        %v265 = vrot.slane %v119, %v264
        %v268 = vsel %vm237, %v261, 0.0
        %v269 = vsel %vm238, %v265, 0.0
        %v270 = vsel %vm186, %v268, 0.0
        %v271 = vsel %vm186, %v269, 0.0
        %v272 = vadd.f32 %v270, %v271
        %273 = vadd.xlane.f32.xlu0 %v272
        %v274 = vpop.xlane.xlu0 %273
        %v276 = vlaneseq
        %v277 = vshrl.u32 %v276, 7
        %v278 = vsub.s32 0, %v277
        %v279 = vrot.slane %v121, %v278
        %v280 = vlaneseq
        %v281 = vshrl.u32 %v280, 7
        %v282 = vsub.s32 1, %v281
        %v283 = vrot.slane %v121, %v282
        %v286 = vsel %vm237, %v279, 0.0
        %v287 = vsel %vm238, %v283, 0.0
        %v288 = vsel %vm186, %v286, 0.0
        %v289 = vsel %vm186, %v287, 0.0
        %v290 = vadd.f32 %v288, %v289
        %291 = vadd.xlane.f32.xlu0 %v290
        %v292 = vpop.xlane.xlu0 %291
      $region29: #{tpu_custom_call.1} parent=23 // loop_footer
        %s134 = sadd.s32 1, %s130
      $region30: #{tpu_custom_call.1} parent=23 // loop_footer_branch
        %129 = sbr.rel target = $region26
      $region31: #{tpu_custom_call.1} parent=23 // loop_exit
        _
      %p293 = scmp.lt.s32.totalorder %s12, 1
      %s294 = scalar_select %p293, %s12, 1
      %s295 = smul.addr %s294, 4
      %s296 = smul.addr %s295, 8
      %s297 = scalar_lea.vmem %s1, %s296
      // Predicated region
      $region32: #{tpu_custom_call.1} parent=23 // pred_check
        %p298 = pneg %p56
      $region33: #{tpu_custom_call.1} parent=23 // pred_check_branch
        %300 = sbr.rel (%p298) target = $region35
      $region34: #{tpu_custom_call.1} parent=23 // pred_region
        _
      $region35: #{tpu_custom_call.1} parent=23 // pred_fallthru
        _
    $region24: #{tpu_custom_call.1} parent=5 // pred_fallthru
      _
    %p301 = scmp.le.s32.totalorder 2, %s7
    // Predicated region
    $region36: #{tpu_custom_call.1} parent=5 // pred_check
      %p302 = pneg %p301
    $region37: #{tpu_custom_call.1} parent=5 // pred_check_branch
      %304 = sbr.rel (%p302) target = $region39
    $region38: #{tpu_custom_call.1} parent=5 // pred_region
      %s305 = ssub.s32 %s7, 2
      // Predicated region
      $region40: #{tpu_custom_call.1} parent=38 // pred_check
        %p306 = pneg %p62
      $region41: #{tpu_custom_call.1} parent=38 // pred_check_branch
        %308 = sbr.rel (%p306) target = $region43
      $region42: #{tpu_custom_call.1} parent=38 // pred_region
        %p309 = scmp.lt.s32.totalorder %s13, 1
        %s310 = scalar_select %p309, %s13, 1
        %s311 = smul.addr %s310, 4
        %s312 = smul.addr %s311, 8
        %s313 = scalar_lea.vmem %s1, %s312
      $region43: #{tpu_custom_call.1} parent=38 // pred_fallthru
        _
    $region39: #{tpu_custom_call.1} parent=5 // pred_fallthru
      _
  $region6: #{tpu_custom_call.1} parent=0 // loop_footer
    %s11 = sadd.s32 1, %s7
  $region7: #{tpu_custom_call.1} parent=0 // loop_footer_branch
    %6 = sbr.rel target = $region3
  $region8: #{tpu_custom_call.1} parent=0 // loop_exit
    _

</llo_original>
